<compile_context>
chip_gen: v6e
topology: v6e:2x2x1
jax: 0.10.0
libtpu: 0.0.40
codegen_flags: <defaults>
</compile_context>

<pallas_src>
import functools

import jax
import jax.numpy as jnp
from jax.experimental import pallas as pl
from jax.experimental.pallas import tpu as pltpu


# Sublane packing per element size (bytes): f32 -> 8, bf16 -> 16, int8/fp8 -> 32.
_SUBLANE_PACK = {1: 32, 2: 16, 4: 8, 8: 8}


def _swish_kernel(x_ref, o_ref, *, beta):
    x = x_ref[...]
    xf = x.astype(jnp.float32)
    z = xf if beta == 1.0 else beta * xf
    # Exact sigmoid with a single EUP transcendental per element:
    #   sigmoid(z) = 0.5 * (1 + tanh(z / 2))
    # The extra mul/adds land on otherwise-idle VALU slots (kernel is HBM-bound).
    sig = 0.5 * (jnp.tanh(0.5 * z) + 1.0)
    o_ref[...] = (xf * sig).astype(o_ref.dtype)


def _tpu_budgets():
    """Return (target_tile_bytes, vmem_limit_bytes), generation aware."""
    vmem = 0
    try:
        info = pltpu.get_tpu_info()
        vmem = int(getattr(info, "vmem_capacity_bytes", 0) or 0)
    except Exception:
        vmem = 0
    if vmem and vmem <= (64 << 20):      # v7x-like: 64 MiB physical VMEM per TC
        return 6 << 20, 44 << 20
    if vmem >= (96 << 20):               # v5e / v6e: 128 MiB physical VMEM
        return 8 << 20, 64 << 20
    return 4 << 20, 32 << 20             # unknown backend: stay conservative


def _choose_lane(n: int) -> int:
    # Wide, lane-dense last dim (multiple of 128) => unmasked back-to-back vst.
    for cand in (2048, 1024, 512, 256, 128):
        if n >= cand * 8:
            return cand
    return 128


def _swish_2d(x2d: jax.Array, beta: float) -> jax.Array:
    """Run the Pallas kernel over a (rows, lane) slab."""
    rows, lane = x2d.shape
    itemsize = jnp.dtype(x2d.dtype).itemsize
    pack = _SUBLANE_PACK.get(itemsize, 8)
    target_tile_bytes, vmem_limit = _tpu_budgets()

    tile_rows = max(1, min(rows, target_tile_bytes // (lane * itemsize)))
    # >= 4 grid steps once the input exceeds ~2 MiB so each v7x TensorCore keeps
    # >= 2 blocks in flight (prefetch / writeback overlap per core); also gives
    # v5e/v6e a real pipeline instead of a single serial step.
    if rows * lane * itemsize > (2 << 20):
        tile_rows = min(tile_rows, pl.cdiv(rows, 4))

    if tile_rows >= rows:
        tile_rows = rows                           # full-extent dim is always legal
    else:
        tile_rows = max(pack, (tile_rows // pack) * pack)  # sublane-packed tiles
        if tile_rows >= rows:
            tile_rows = rows

    grid = (pl.cdiv(rows, tile_rows),)             # ragged last block masked by Pallas

    return pl.pallas_call(
        functools.partial(_swish_kernel, beta=float(beta)),
        out_shape=jax.ShapeDtypeStruct((rows, lane), x2d.dtype),
        grid_spec=pltpu.PrefetchScalarGridSpec(
            num_scalar_prefetch=0,
            grid=grid,
            in_specs=[pl.BlockSpec((tile_rows, lane), lambda i: (i, 0))],
            out_specs=pl.BlockSpec((tile_rows, lane), lambda i: (i, 0)),
        ),
        compiler_params=pltpu.CompilerParams(
            dimension_semantics=("parallel",),
            vmem_limit_bytes=vmem_limit,
        ),
    )(x2d)


def swish(x: jax.Array, beta: float = 1.0) -> jax.Array:
    """Element-wise Swish: x * sigmoid(beta * x), computed in a Pallas TPU kernel."""
    orig_shape = x.shape
    n = x.size
    if n == 0:
        return x

    x_flat = x.reshape(-1)                         # copy-free for contiguous inputs
    lane = _choose_lane(n)

    if n < lane:
        # Tiny input: one full-array block (block shape == array shape).
        out = _swish_2d(x_flat.reshape(1, n), beta)
        return out.reshape(orig_shape)

    # Lane-aligned prefix through the kernel; the (< lane) tail in plain JAX.
    # No full-array jnp.pad / trailing slice copies.
    n_main = (n // lane) * lane
    main = _swish_2d(x_flat[:n_main].reshape(n_main // lane, lane), beta).reshape(-1)
    if n_main == n:
        return main.reshape(orig_shape)

    tail = x_flat[n_main:]
    tail_f = tail.astype(jnp.float32)
    tail_out = (tail_f * jax.nn.sigmoid(beta * tail_f)).astype(tail.dtype)
    return jnp.concatenate([main, tail_out]).reshape(orig_shape)


class Swish:
    """JAX/Pallas equivalent of torchlayers.activations.Swish."""

    def __init__(self, beta: float = 1.0):
        self.beta = beta

    def __call__(self, x: jax.Array) -> jax.Array:
        return swish(x, self.beta)


if __name__ == "__main__":
    key = jax.random.PRNGKey(0)
    x = jax.random.normal(key, (2, 4, 16, 16), dtype=jnp.float32)

    module = Swish(beta=1.0)
    out = jax.block_until_ready(module(x))

    ref = x * jax.nn.sigmoid(1.0 * x)
    assert out.shape == x.shape and out.dtype == x.dtype
    assert jnp.allclose(out, ref, atol=1e-4, rtol=1e-4)

    # Non-unit beta on an unaligned shape (exercises the prefix + tail path).
    beta = 1.7
    x2 = jax.random.normal(jax.random.PRNGKey(1), (3, 5, 17, 19), dtype=jnp.float32)
    out2 = jax.block_until_ready(Swish(beta=beta)(x2))
    ref2 = x2 * jax.nn.sigmoid(beta * x2)
    assert out2.shape == x2.shape and out2.dtype == x2.dtype
    assert jnp.allclose(out2, ref2, atol=1e-4, rtol=1e-4)

    print("KERNEL_OK")
</pallas_src>

<mosaic_0001>
module attributes {stable_mosaic.version = 11 : i64} {
  func.func @_swish_kernel(%arg0: i32, %arg1: memref<8x256xf32, #tpu.memory_space<vmem>>, %arg2: memref<8x256xf32, #tpu.memory_space<vmem>>) attributes {dimension_semantics = [#tpu.dimension_semantics<parallel>], iteration_bounds = array<i64: 1>, scalar_prefetch = 0 : i64, scratch_operands = 0 : i64, tpu.core_type = #tpu.core_type<tc>, window_params = [{transform_indices = @transform_0, window_bounds = array<i64: 8, 256>}, {transform_indices = @transform_1, window_bounds = array<i64: 8, 256>}]} {
    %c0 = arith.constant 0 : index
    %c0_0 = arith.constant 0 : index
    %0 = vector.load %arg1[%c0, %c0_0] : memref<8x256xf32, #tpu.memory_space<vmem>>, vector<8x256xf32>
    %cst = arith.constant 5.000000e-01 : f32
    %1 = vector.broadcast %cst : f32 to vector<8x256xf32>
    %2 = arith.mulf %1, %0 : vector<8x256xf32>
    %3 = math.tanh %2 : vector<8x256xf32>
    %cst_1 = arith.constant 1.000000e+00 : f32
    %4 = vector.broadcast %cst_1 : f32 to vector<8x256xf32>
    %5 = arith.addf %3, %4 : vector<8x256xf32>
    %cst_2 = arith.constant 5.000000e-01 : f32
    %6 = vector.broadcast %cst_2 : f32 to vector<8x256xf32>
    %7 = arith.mulf %6, %5 : vector<8x256xf32>
    %8 = arith.mulf %0, %7 : vector<8x256xf32>
    %c0_3 = arith.constant 0 : index
    %c0_4 = arith.constant 0 : index
    %9 = vector.load %arg2[%c0_3, %c0_4] : memref<8x256xf32, #tpu.memory_space<vmem>>, vector<8x256xf32>
    tpu.vector_store %arg2[%c0_3, %c0_4], %8 {strides = array<i32>} : memref<8x256xf32, #tpu.memory_space<vmem>>, vector<8x256xf32>,
    return
  }
  func.func @transform_0(%arg0: i32) -> (i32, i32) {
    %c0_i32 = arith.constant 0 : i32
    %c0_i32_0 = arith.constant 0 : i32
    return %arg0, %c0_i32 : i32, i32
  }
  func.func @transform_1(%arg0: i32) -> (i32, i32) {
    %c0_i32 = arith.constant 0 : i32
    %c0_i32_0 = arith.constant 0 : i32
    return %arg0, %c0_i32 : i32, i32
  }
}

</mosaic_0001>

<llo_original>
// kernel: tpu_custom_call.1
$region0: #{tpu_custom_call.1}
  #allocation0 [shape = 'u32[]', space=smem, size = 0x4, offset = 0x4, fixed_abs, tag = 'smem constant byte address 0x4 - core index']
  #allocation1 [shape = 'u32[144,128]{1,0:T(1,128)}', space=vmem, size = 0x12000, scoped, tag = 'internal scratch']
  %s0 = inlined_call_operand.hbm [shape: f32[8,256], index: 0, kind: input, shape index: {}]
  %s1 = inlined_call_operand.hbm [shape: f32[8,256], index: 1, kind: output, shape index: {}]
  %s2 = sld [smem:[#allocation0]]
  $region18: #{tpu_custom_call.1} parent=0
    _
  %s4 = ssub.s32 1, %s2
  %s5 = scalar_select 0, %s4, %s2
  $region1: #{tpu_custom_call.1} parent=0
    #allocation2 [shape = 'u8[8192]{0}', space=vmem, size = 0x2000, scoped, tag = 'input window, operand 0, single buffered']
    #allocation3 [shape = 's32[1]{0}', space=sflag, size = 0x4, scoped, tag = 'scoped memory for tpu_custom_call.1']
    #allocation4 [shape = 's32[1]{0}', space=sflag, size = 0x4, scoped, tag = 'scoped memory for tpu_custom_call.1']
    #allocation5 [shape = 'u8[8192]{0}', space=vmem, size = 0x2000, scoped, tag = 'output window, operand 0, single buffered']
    %6 = vsyncpa [#allocation3], 0
    %7 = vsyncpa [#allocation4], 0
    // Predicated region
    $region2: #{tpu_custom_call.1} parent=1 // pred_check
      _
    $region3: #{tpu_custom_call.1} parent=1 // pred_check_branch
      %9 = sbr.rel (0) target = $region5
    $region4: #{tpu_custom_call.1} parent=1 // pred_region
      %s11 = ssub.s32 256, 256
      %12 = vsyncadd [#allocation3], %s11
      %s14 = sshll.u32 [#allocation2], 4
      %s15 = int_to_ptr.vmem [resolvable:$true] %s14
      %17 = dma.hbm_to_vmem [thread:$0]  %s0, 256, %s15, [#allocation3]
    $region5: #{tpu_custom_call.1} parent=1 // pred_fallthru
      _
    // Predicated region
    $region6: #{tpu_custom_call.1} parent=1 // pred_check
      _
    $region7: #{tpu_custom_call.1} parent=1 // pred_check_branch
      %19 = sbr.rel (0) target = $region9
    $region8: #{tpu_custom_call.1} parent=1 // pred_region
      %20 = dma.done [#allocation3], 256
    $region9: #{tpu_custom_call.1} parent=1 // pred_fallthru
      _
    %v21 = vld [vmem:[#allocation2] sm:$0xff]
    %v22 = vld [vmem:[#allocation2 + $0x8] sm:$0xff]
    %v23 = vmul.f32 %v21, 0.5
    %v24 = vmul.f32 %v22, 0.5
    %v25 = vtanh.pop %v23
    %v26 = vtanh.pop %v24
    %v27 = vadd.f32 %v25, 1.0
    %v28 = vadd.f32 %v26, 1.0
    %v29 = vmul.f32 %v27, 0.5
    %v30 = vmul.f32 %v28, 0.5
    %v31 = vmul.f32 %v21, %v29
    %v32 = vmul.f32 %v22, %v30
    %33 = vst [vmem:[#allocation5] sm:$0xff] %v31
    %34 = vst [vmem:[#allocation5 + $0x8] sm:$0xff] %v32
    // Predicated region
    $region10: #{tpu_custom_call.1} parent=1 // pred_check
      _
    $region11: #{tpu_custom_call.1} parent=1 // pred_check_branch
      %36 = sbr.rel (0) target = $region13
    $region12: #{tpu_custom_call.1} parent=1 // pred_region
      %s38 = ssub.s32 256, 256
      %39 = vsyncadd [#allocation4], %s38
      %s41 = sshll.u32 [#allocation5], 4
      %s42 = int_to_ptr.vmem [resolvable:$true] %s41
      %44 = dma.vmem_to_hbm [thread:$0]  %s42, 256, %s1, [#allocation4]
    $region13: #{tpu_custom_call.1} parent=1 // pred_fallthru
      _
    // Predicated region
    $region14: #{tpu_custom_call.1} parent=1 // pred_check
      _
    $region15: #{tpu_custom_call.1} parent=1 // pred_check_branch
      %46 = sbr.rel (0) target = $region17
    $region16: #{tpu_custom_call.1} parent=1 // pred_region
      %47 = dma.done [#allocation4], 256
    $region17: #{tpu_custom_call.1} parent=1 // pred_fallthru
      _
    %48 = vsyncpa [#allocation3], 1
    %49 = vsyncpa [#allocation4], 1

</llo_original>
